<compile_context>
chip_gen: v7x
topology: tpu7x:2x2x1
jax: 0.10.0
libtpu: 0.0.40
codegen_flags: <defaults>
</compile_context>

<pallas_src>
import jax
import jax.numpy as jnp
from jax.experimental import pallas as pl
from jax.experimental.pallas import tpu as pltpu
import numpy as np

VMEM_LIMIT = 64 * 1024 * 1024


def _round_up(x, m):
    return (x + m - 1) // m * m


# ---------------------------------------------------------------------------
# Generic fused matmul + bias kernel:  out = x @ w + b   (f32 accumulation)
# Used for both the hoisted input projection and the hoisted dense projection.
# ---------------------------------------------------------------------------
def matmul_bias_kernel(x_ref, w_ref, b_ref, o_ref):
    o_ref[...] = (jnp.dot(x_ref[...], w_ref[...],
                          preferred_element_type=jnp.float32)
                  + b_ref[...])


def matmul_bias(x, w, b, *, tn=128, tm_max=256):
    """x: (M, K), w: (K, N), b: (1, N) f32  ->  (M, N) f32."""
    M, K = x.shape
    N = w.shape[1]
    tm = tm_max if M % tm_max == 0 else M          # full-dim block is always legal
    tn = tn if N % tn == 0 else N
    grid = (M // tm, N // tn)
    return pl.pallas_call(
        matmul_bias_kernel,
        out_shape=jax.ShapeDtypeStruct((M, N), jnp.float32),
        grid_spec=pltpu.PrefetchScalarGridSpec(
            num_scalar_prefetch=0,
            grid=grid,
            in_specs=[
                pl.BlockSpec((tm, K), lambda i, j: (i, 0)),
                pl.BlockSpec((K, tn), lambda i, j: (0, j)),
                pl.BlockSpec((1, tn), lambda i, j: (0, j)),
            ],
            out_specs=pl.BlockSpec((tm, tn), lambda i, j: (i, j)),
        ),
        compiler_params=pltpu.CompilerParams(
            dimension_semantics=("parallel", "parallel"),
            vmem_limit_bytes=VMEM_LIMIT),
    )(x, w, b)


# ---------------------------------------------------------------------------
# Recurrent kernel: one grid step = one chunk of t_chunk timesteps.
# Per timestep only the truly-recurrent matmul h_prev @ W_hh^T is done here;
# the input gates XG were precomputed outside.
# ---------------------------------------------------------------------------
def lstm_recurrence_kernel(xg_ref, whh_ref, h0_ref, c0_ref,
                           hseq_ref, hN_ref, cN_ref,
                           h_sc, c_sc):
    s = pl.program_id(0)
    H = h_sc.shape[1]
    Tc = xg_ref.shape[0]

    @pl.when(s == 0)
    def _():
        h_sc[...] = h0_ref[...]
        c_sc[...] = c0_ref[...]

    w_hh = whh_ref[...]                       # (H, 4H), compute dtype

    def step(t, carry):
        h_prev, c_prev = carry                # f32 (B, H)
        gates = xg_ref[t] + jnp.dot(h_prev.astype(w_hh.dtype), w_hh,
                                    preferred_element_type=jnp.float32)
        # PyTorch gate order [i, f, g, o]; gate math stays in f32 (VPU/EUP).
        i = jax.nn.sigmoid(gates[:, 0 * H:1 * H])
        f = jax.nn.sigmoid(gates[:, 1 * H:2 * H])
        g = jnp.tanh(gates[:, 2 * H:3 * H])
        o = jax.nn.sigmoid(gates[:, 3 * H:4 * H])
        c = f * c_prev + i * g
        h = o * jnp.tanh(c)
        hseq_ref[t] = h.astype(hseq_ref.dtype)
        return (h, c)

    h_fin, c_fin = jax.lax.fori_loop(0, Tc, step, (h_sc[...], c_sc[...]),
                                     unroll=True)
    h_sc[...] = h_fin
    c_sc[...] = c_fin
    hN_ref[...] = h_fin
    cN_ref[...] = c_fin


def simple_lstm_forward(x_tokens, prev_state, params, *,
                        compute_dtype=jnp.bfloat16, t_chunk=4):
    """x_tokens: (B, T) int32; prev_state: (h0, c0) each (1, B, H)."""
    emb, w_ih, w_hh, b_ih, b_hh, w_d, b_d = (
        params["emb"], params["w_ih"], params["w_hh"],
        params["b_ih"], params["b_hh"], params["w_d"], params["b_d"])

    B, T = x_tokens.shape
    H = emb.shape[1]
    V = w_d.shape[0]
    h0, c0 = prev_state

    # --- padding for TPU alignment (padded rows/cols are independent; sliced off) ---
    B_pad = _round_up(B, 8)                  # sublane-aligned batch
    V_pad = _round_up(V, 128)                # lane-dense logits stores
    if B_pad != B:
        x_tokens = jnp.pad(x_tokens, ((0, B_pad - B), (0, 0)))
    h0_p = jnp.pad(h0[0], ((0, B_pad - B), (0, 0)))          # (B_pad, H) f32
    c0_p = jnp.pad(c0[0], ((0, B_pad - B), (0, 0)))

    # --- glue: embedding gather, directly into time-major layout (no transpose pass) ---
    x_emb = jnp.take(emb, x_tokens.T, axis=0)                # (T, B_pad, H)

    # --- weight prep (bf16 for MXU, f32 bias) ---
    w_ih_t = w_ih.T.astype(compute_dtype)                    # (H, 4H)
    w_hh_t = w_hh.T.astype(compute_dtype)                    # (H, 4H)
    b_gate = (b_ih + b_hh).reshape(1, 4 * H).astype(jnp.float32)
    w_d_t = jnp.pad(w_d.T, ((0, 0), (0, V_pad - V))).astype(compute_dtype)   # (H, V_pad)
    b_d_p = jnp.pad(b_d, (0, V_pad - V)).reshape(1, V_pad).astype(jnp.float32)

    # --- (1) hoisted input projection: one big MXU-dense matmul over all timesteps ---
    xg2d = matmul_bias(x_emb.reshape(T * B_pad, H).astype(compute_dtype),
                       w_ih_t, b_gate)                       # (T*B_pad, 4H) f32
    xg = xg2d.reshape(T, B_pad, 4 * H)

    # --- (2) recurrence: chunked time loop inside the kernel, h/c in VMEM scratch ---
    tc = t_chunk if (T % t_chunk == 0) else T
    n_chunks = T // tc
    hseq_dtype = compute_dtype

    h_seq, hN, cN = pl.pallas_call(
        lstm_recurrence_kernel,
        out_shape=(
            jax.ShapeDtypeStruct((T, B_pad, H), hseq_dtype),
            jax.ShapeDtypeStruct((B_pad, H), jnp.float32),
            jax.ShapeDtypeStruct((B_pad, H), jnp.float32),
        ),
        grid_spec=pltpu.PrefetchScalarGridSpec(
            num_scalar_prefetch=0,
            grid=(n_chunks,),
            in_specs=[
                pl.BlockSpec((tc, B_pad, 4 * H), lambda s: (s, 0, 0)),   # XG chunk
                pl.BlockSpec((H, 4 * H), lambda s: (0, 0)),              # W_hh^T
                pl.BlockSpec((B_pad, H), lambda s: (0, 0)),              # h0
                pl.BlockSpec((B_pad, H), lambda s: (0, 0)),              # c0
            ],
            out_specs=[
                pl.BlockSpec((tc, B_pad, H), lambda s: (s, 0, 0)),       # h sequence
                pl.BlockSpec((B_pad, H), lambda s: (0, 0)),              # final h
                pl.BlockSpec((B_pad, H), lambda s: (0, 0)),              # final c
            ],
            scratch_shapes=[
                pltpu.VMEM((B_pad, H), jnp.float32),                     # carried h (f32)
                pltpu.VMEM((B_pad, H), jnp.float32),                     # carried c (f32)
            ],
        ),
        compiler_params=pltpu.CompilerParams(
            dimension_semantics=("arbitrary",),                          # sequential in time
            vmem_limit_bytes=VMEM_LIMIT),
    )(xg, w_hh_t, h0_p, c0_p)

    # --- (3) hoisted dense projection: one matmul, tiled over lane-padded vocab ---
    logits2d = matmul_bias(h_seq.reshape(T * B_pad, H).astype(compute_dtype),
                           w_d_t, b_d_p)                     # (T*B_pad, V_pad) f32
    logits = jnp.transpose(
        logits2d.reshape(T, B_pad, V_pad)[:, :B, :V], (1, 0, 2))   # (B, T, V)

    hN_out = hN[:B][None]                                    # (1, B, H)
    cN_out = cN[:B][None]
    return logits, (hN_out, cN_out)


# ---------------------------------------------------------------------------
# Pure-JAX reference matching PyTorch nn.LSTM semantics (gate order i, f, g, o).
# ---------------------------------------------------------------------------
def reference_forward(x_tokens, prev_state, params):
    emb, w_ih, w_hh, b_ih, b_hh, w_d, b_d = (
        params["emb"], params["w_ih"], params["w_hh"],
        params["b_ih"], params["b_hh"], params["w_d"], params["b_d"])
    H = emb.shape[1]
    h0, c0 = prev_state
    x_emb = jnp.take(emb, x_tokens, axis=0)                  # (B, T, H)

    def step(carry, x_t):
        h, c = carry
        gates = x_t @ w_ih.T + h @ w_hh.T + b_ih + b_hh
        i = jax.nn.sigmoid(gates[:, 0 * H:1 * H])
        f = jax.nn.sigmoid(gates[:, 1 * H:2 * H])
        g = jnp.tanh(gates[:, 2 * H:3 * H])
        o = jax.nn.sigmoid(gates[:, 3 * H:4 * H])
        c = f * c + i * g
        h = o * jnp.tanh(c)
        return (h, c), h

    (hN, cN), hs = jax.lax.scan(step, (h0[0], c0[0]),
                                jnp.transpose(x_emb, (1, 0, 2)))
    out = jnp.transpose(hs, (1, 0, 2))                       # (B, T, H)
    logits = out @ w_d.T + b_d
    return logits, (hN[None], cN[None])


if __name__ == "__main__":
    B, T, H, V = 2, 8, 32, 16   # batch, seq, hidden_size, num_words
    key = jax.random.PRNGKey(0)
    ks = jax.random.split(key, 8)
    bound = 1.0 / np.sqrt(H)

    params = {
        "emb":  jax.random.normal(ks[0], (V, H), jnp.float32),   # nn.Embedding default N(0,1)
        "w_ih": jax.random.uniform(ks[1], (4 * H, H), jnp.float32, -bound, bound),
        "w_hh": jax.random.uniform(ks[2], (4 * H, H), jnp.float32, -bound, bound),
        "b_ih": jax.random.uniform(ks[3], (4 * H,), jnp.float32, -bound, bound),
        "b_hh": jax.random.uniform(ks[4], (4 * H,), jnp.float32, -bound, bound),
        "w_d":  jax.random.uniform(ks[5], (V, H), jnp.float32, -bound, bound),
        "b_d":  jax.random.uniform(ks[6], (V,), jnp.float32, -bound, bound),
    }

    x_tokens = jax.random.randint(ks[7], (B, T), 0, V, dtype=jnp.int32)
    prev_state = (jnp.zeros((1, B, H), jnp.float32),   # zero_state: (num_layers, B, H)
                  jnp.zeros((1, B, H), jnp.float32))

    ref_logits, (ref_h, ref_c) = reference_forward(x_tokens, prev_state, params)

    # f32 path (exact semantics check)
    logits32, (h32, c32) = simple_lstm_forward(
        x_tokens, prev_state, params, compute_dtype=jnp.float32)
    jax.block_until_ready((logits32, h32, c32))
    np.testing.assert_allclose(np.asarray(logits32), np.asarray(ref_logits), rtol=1e-5, atol=1e-5)
    np.testing.assert_allclose(np.asarray(h32), np.asarray(ref_h), rtol=1e-5, atol=1e-5)
    np.testing.assert_allclose(np.asarray(c32), np.asarray(ref_c), rtol=1e-5, atol=1e-5)

    # bf16-matmul / f32-accumulation path (performance configuration)
    logits_bf, (h_bf, c_bf) = simple_lstm_forward(
        x_tokens, prev_state, params, compute_dtype=jnp.bfloat16)
    jax.block_until_ready((logits_bf, h_bf, c_bf))
    np.testing.assert_allclose(np.asarray(logits_bf), np.asarray(ref_logits), rtol=5e-2, atol=5e-2)
    np.testing.assert_allclose(np.asarray(h_bf), np.asarray(ref_h), rtol=5e-2, atol=5e-2)
    np.testing.assert_allclose(np.asarray(c_bf), np.asarray(ref_c), rtol=5e-2, atol=5e-2)

    print("KERNEL_OK")
</pallas_src>

<mosaic_0001>
module attributes {stable_mosaic.version = 11 : i64} {
  func.func @matmul_bias_kernel(%arg0: i32, %arg1: i32, %arg2: memref<64x32xf32, #tpu.memory_space<vmem>>, %arg3: memref<32x128xf32, #tpu.memory_space<vmem>>, %arg4: memref<1x128xf32, #tpu.memory_space<vmem>>, %arg5: memref<64x128xf32, #tpu.memory_space<vmem>>) attributes {dimension_semantics = [#tpu.dimension_semantics<parallel>, #tpu.dimension_semantics<parallel>], iteration_bounds = array<i64: 1, 1>, scalar_prefetch = 0 : i64, scratch_operands = 0 : i64, tpu.core_type = #tpu.core_type<tc>, window_params = [{transform_indices = @transform_0, window_bounds = array<i64: 64, 32>}, {transform_indices = @transform_1, window_bounds = array<i64: 32, 128>}, {transform_indices = @transform_2, window_bounds = array<i64: 1, 128>}, {transform_indices = @transform_3, window_bounds = array<i64: 64, 128>}]} {
    %c0 = arith.constant 0 : index
    %c0_0 = arith.constant 0 : index
    %0 = vector.load %arg2[%c0, %c0_0] : memref<64x32xf32, #tpu.memory_space<vmem>>, vector<64x32xf32>
    %c0_1 = arith.constant 0 : index
    %c0_2 = arith.constant 0 : index
    %1 = vector.load %arg3[%c0_1, %c0_2] : memref<32x128xf32, #tpu.memory_space<vmem>>, vector<32x128xf32>
    %cst = arith.constant dense<0.000000e+00> : vector<64x128xf32>
    %2 = tpu.matmul %0, %1, %cst {dimension_numbers = #tpu.dot_dimension_numbers<[1], [0], [0], [1], [0, 0, 1, 1], [], []>} : vector<64x32xf32>, vector<32x128xf32>, vector<64x128xf32> -> vector<64x128xf32>
    %c0_3 = arith.constant 0 : index
    %c0_4 = arith.constant 0 : index
    %3 = vector.load %arg4[%c0_3, %c0_4] : memref<1x128xf32, #tpu.memory_space<vmem>>, vector<1x128xf32>
    %4 = vector.broadcast %3 : vector<1x128xf32> to vector<64x128xf32>
    %5 = arith.addf %2, %4 : vector<64x128xf32>
    %c0_5 = arith.constant 0 : index
    %c0_6 = arith.constant 0 : index
    %6 = vector.load %arg5[%c0_5, %c0_6] : memref<64x128xf32, #tpu.memory_space<vmem>>, vector<64x128xf32>
    tpu.vector_store %arg5[%c0_5, %c0_6], %5 {strides = array<i32>} : memref<64x128xf32, #tpu.memory_space<vmem>>, vector<64x128xf32>,
    return
  }
  func.func @transform_0(%arg0: i32, %arg1: i32) -> (i32, i32) {
    %c0_i32 = arith.constant 0 : i32
    %c0_i32_0 = arith.constant 0 : i32
    return %arg0, %c0_i32 : i32, i32
  }
  func.func @transform_1(%arg0: i32, %arg1: i32) -> (i32, i32) {
    %c0_i32 = arith.constant 0 : i32
    %c0_i32_0 = arith.constant 0 : i32
    return %c0_i32, %arg1 : i32, i32
  }
  func.func @transform_2(%arg0: i32, %arg1: i32) -> (i32, i32) {
    %c0_i32 = arith.constant 0 : i32
    %c0_i32_0 = arith.constant 0 : i32
    return %c0_i32, %arg1 : i32, i32
  }
  func.func @transform_3(%arg0: i32, %arg1: i32) -> (i32, i32) {
    %c0_i32 = arith.constant 0 : i32
    return %arg0, %arg1 : i32, i32
  }
}

</mosaic_0001>

<llo_original>
// kernel: tpu_custom_call.1
$region0: #{tpu_custom_call.1}
  #allocation0 [shape = 'u32[]', space=smem, size = 0x4, offset = 0x4, fixed_abs, tag = 'smem constant byte address 0x4 - core index']
  #allocation1 [shape = 'u32[144,128]{1,0:T(1,128)}', space=vmem, size = 0x12000, scoped, tag = 'internal scratch']
  %s0 = inlined_call_operand.hbm [shape: f32[64,32], index: 0, kind: input, shape index: {}]
  %s1 = inlined_call_operand.hbm [shape: f32[32,128], index: 1, kind: input, shape index: {}]
  %s2 = inlined_call_operand.hbm [shape: f32[1,128], index: 2, kind: input, shape index: {}]
  %s3 = inlined_call_operand.hbm [shape: f32[64,128], index: 3, kind: output, shape index: {}]
  %s4 = sld [smem:[#allocation0]]
  $region34: #{tpu_custom_call.1} parent=0
    _
  %s6 = ssub.s32 1, %s4
  %s7 = scalar_select 0, %s6, %s4
  $region1: #{tpu_custom_call.1} parent=0
    #allocation2 [shape = 'u8[32768]{0}', space=vmem, size = 0x8000, scoped, tag = 'input window, operand 0, single buffered']
    #allocation3 [shape = 's32[1]{0}', space=sflag, size = 0x4, scoped, tag = 'scoped memory for tpu_custom_call.1']
    #allocation4 [shape = 's32[1]{0}', space=sflag, size = 0x4, scoped, tag = 'scoped memory for tpu_custom_call.1']
    #allocation5 [shape = 'u8[16384]{0}', space=vmem, size = 0x4000, scoped, tag = 'input window, operand 1, single buffered']
    #allocation6 [shape = 's32[1]{0}', space=sflag, size = 0x4, scoped, tag = 'scoped memory for tpu_custom_call.1']
    #allocation7 [shape = 'u8[512]{0}', space=vmem, size = 0x400, scoped, tag = 'input window, operand 2, single buffered']
    #allocation8 [shape = 'u8[32768]{0}', space=vmem, size = 0x8000, scoped, tag = 'output window, operand 0, single buffered']
    %8 = vsyncpa [#allocation3], 0
    %9 = vsyncpa [#allocation6], 0
    %10 = vsyncpa [#allocation4], 0
    // Predicated region
    $region2: #{tpu_custom_call.1} parent=1 // pred_check
      _
    $region3: #{tpu_custom_call.1} parent=1 // pred_check_branch
      %12 = sbr.rel (0) target = $region5
    $region4: #{tpu_custom_call.1} parent=1 // pred_region
      %s14 = ssub.s32 1024, 1024
      %15 = vsyncadd [#allocation3], %s14
      %s16 = sshll.u32 [#allocation2], 4
      %s17 = int_to_ptr.vmem [resolvable:$true] %s16
      %22 = dma.hbm_to_vmem [thread:$0]  %s0, 1024, %s17, [#allocation3], 128, 128, 8
    $region5: #{tpu_custom_call.1} parent=1 // pred_fallthru
      _
    // Predicated region
    $region6: #{tpu_custom_call.1} parent=1 // pred_check
      _
    $region7: #{tpu_custom_call.1} parent=1 // pred_check_branch
      %24 = sbr.rel (0) target = $region9
    $region8: #{tpu_custom_call.1} parent=1 // pred_region
      %s26 = ssub.s32 512, 512
      %27 = vsyncadd [#allocation6], %s26
      %s28 = sshll.u32 [#allocation5], 4
      %s29 = int_to_ptr.vmem [resolvable:$true] %s28
      %34 = dma.hbm_to_vmem [thread:$0]  %s1, 512, %s29, [#allocation6], 128, 128, 8
    $region9: #{tpu_custom_call.1} parent=1 // pred_fallthru
      _
    // Predicated region
    $region10: #{tpu_custom_call.1} parent=1 // pred_check
      _
    $region11: #{tpu_custom_call.1} parent=1 // pred_check_branch
      %36 = sbr.rel (0) target = $region13
    $region12: #{tpu_custom_call.1} parent=1 // pred_region
      %s38 = ssub.s32 16, 16
      %39 = vsyncadd [#allocation6], %s38
      %s41 = sshll.u32 [#allocation7], 4
      %s42 = int_to_ptr.vmem [resolvable:$true] %s41
      %44 = dma.hbm_to_vmem [thread:$0]  %s2, 16, %s42, [#allocation6]
    $region13: #{tpu_custom_call.1} parent=1 // pred_fallthru
      _
    // Predicated region
    $region14: #{tpu_custom_call.1} parent=1 // pred_check
      _
    $region15: #{tpu_custom_call.1} parent=1 // pred_check_branch
      %46 = sbr.rel (0) target = $region17
    $region16: #{tpu_custom_call.1} parent=1 // pred_region
      %47 = dma.done [#allocation3], 1024
    $region17: #{tpu_custom_call.1} parent=1 // pred_fallthru
      _
    // Predicated region
    $region18: #{tpu_custom_call.1} parent=1 // pred_check
      _
    $region19: #{tpu_custom_call.1} parent=1 // pred_check_branch
      %49 = sbr.rel (0) target = $region21
    $region20: #{tpu_custom_call.1} parent=1 // pred_region
      %50 = dma.done [#allocation6], 512
    $region21: #{tpu_custom_call.1} parent=1 // pred_fallthru
      _
    // Predicated region
    $region22: #{tpu_custom_call.1} parent=1 // pred_check
      _
    $region23: #{tpu_custom_call.1} parent=1 // pred_check_branch
      %52 = sbr.rel (0) target = $region25
    $region24: #{tpu_custom_call.1} parent=1 // pred_region
      %53 = dma.done [#allocation6], 16
    $region25: #{tpu_custom_call.1} parent=1 // pred_fallthru
      _
    %v54 = vld [vmem:[#allocation2] sm:$0xff]
    %v55 = vld [vmem:[#allocation2 + $0x8] sm:$0xff]
    %v56 = vld [vmem:[#allocation2 + $0x10] sm:$0xff]
    %v57 = vld [vmem:[#allocation2 + $0x18] sm:$0xff]
    %v58 = vld [vmem:[#allocation2 + $0x20] sm:$0xff]
    %v59 = vld [vmem:[#allocation2 + $0x28] sm:$0xff]
    %v60 = vld [vmem:[#allocation2 + $0x30] sm:$0xff]
    %v61 = vld [vmem:[#allocation2 + $0x38] sm:$0xff]
    %v62 = vld [vmem:[#allocation5] sm:$0xff]
    %v63 = vld [vmem:[#allocation5 + $0x8] sm:$0xff]
    %v64 = vld [vmem:[#allocation5 + $0x10] sm:$0xff]
    %v65 = vld [vmem:[#allocation5 + $0x18] sm:$0xff]
    %v66 = vld [vmem:[#allocation7] sm:$0x1]
    %v68 = vlaneseq
    %v69 = vshrl.u32 %v68, 7
    %v70 = vsub.s32 0, %v69
    %v71 = vrot.slane %v66, %v70
    %vm73 = vcmask 261120
    %v75 = vsel %vm73, %v54, 0
    %v78 = vsel %vm73, %v55, 0
    %v81 = vsel %vm73, %v56, 0
    %v84 = vsel %vm73, %v57, 0
    %v87 = vsel %vm73, %v58, 0
    %v90 = vsel %vm73, %v59, 0
    %v93 = vsel %vm73, %v60, 0
    %v96 = vsel %vm73, %v61, 0
    %98 = vmatprep.subr.mxu0 0.0
    %99 = vmatpush1.msra.mxu0 %v62
    %100 = vmatprep.subr.mxu0 0.0
    %101 = vmatpush1.msra.mxu0 %v63
    %102 = vmatprep.subr.mxu0 0.0
    %103 = vmatpush1.msra.mxu0 %v64
    %104 = vmatprep.subr.mxu0 0.0
    %105 = vmatpush1.msra.mxu0 %v65
    %106 = vmatprep.subr.mxu0 0.0
    %107 = vmatpush1.msra.mxu0 0.0
    %108 = vmatprep.subr.mxu0 0.0
    %109 = vmatpush1.msra.mxu0 0.0
    %110 = vmatprep.subr.mxu0 0.0
    %111 = vmatpush1.msra.mxu0 0.0
    %112 = vmatprep.subr.mxu0 0.0
    %113 = vmatpush1.msra.mxu0 0.0
    %114 = vmatprep.subr.mxu0 0.0
    %115 = vmatpush1.msra.mxu0 0.0
    %116 = vmatprep.subr.mxu0 0.0
    %117 = vmatpush1.msra.mxu0 0.0
    %118 = vmatprep.subr.mxu0 0.0
    %119 = vmatpush1.msra.mxu0 0.0
    %120 = vmatprep.subr.mxu0 0.0
    %121 = vmatpush1.msra.mxu0 0.0
    %122 = vmatprep.subr.mxu0 0.0
    %123 = vmatpush1.msra.mxu0 0.0
    %124 = vmatprep.subr.mxu0 0.0
    %125 = vmatpush1.msra.mxu0 0.0
    %126 = vmatprep.subr.mxu0 0.0
    %127 = vmatpush1.msra.mxu0 0.0
    %128 = vmatprep.subr.mxu0 0.0
    %129 = vmatpush1.msra.mxu0 0.0
    %130 = vmatprep.subr.mxu0 0.0
    %131 = vmatpush1.msra.mxu0 0.0
    %132 = vmatprep.subr.mxu0 0.0
    %133 = vmatpush1.msra.mxu0 0.0
    %134 = vmatprep.subr.mxu0 0.0
    %135 = vmatpush1.msra.mxu0 0.0
    %136 = vmatprep.subr.mxu0 0.0
    %137 = vmatpush1.msra.mxu0 0.0
    %138 = vmatprep.subr.mxu0 0.0
    %139 = vmatpush1.msra.mxu0 0.0
    %140 = vmatprep.subr.mxu0 0.0
    %141 = vmatpush1.msra.mxu0 0.0
    %142 = vmatprep.subr.mxu0 0.0
    %143 = vmatpush1.msra.mxu0 0.0
    %144 = vmatprep.subr.mxu0 0.0
    %145 = vmatpush1.msra.mxu0 0.0
    %146 = vmatprep.subr.mxu0 0.0
    %147 = vmatpush1.msra.mxu0 0.0
    %148 = vmatprep.subr.mxu0 0.0
    %149 = vmatpush1.msra.mxu0 0.0
    %150 = vmatprep.subr.mxu0 0.0
    %151 = vmatpush1.msra.mxu0 0.0
    %152 = vmatprep.subr.mxu0 0.0
    %153 = vmatpush1.msra.mxu0 0.0
    %154 = vmatprep.subr.mxu0 0.0
    %155 = vmatpush1.msra.mxu0 0.0
    %156 = vmatprep.subr.mxu0 0.0
    %157 = vmatpush1.msra.mxu0 0.0
    %158 = vmatprep.subr.mxu0 0.0
    %159 = vmatpush1.msra.mxu0 0.0
    %160 = vmatprep.subr.mxu0 0.0
    %161 = vmatpush1.msra.mxu0 0.0
    %162 = vmatprep.mubr.f32.mxu0 0.0
    %163 = vmatmul.mubr.f32.gmra.mrb[0].mxu0 %v75
    %v164 = vpop.f32.mrb[0].mxu0
    %v165 = vadd.f32 %v71, %v164
    %v166 = vpop.f32.mrb[0].mxu0
    %167 = vmatprep.mubr.f32.mxu0 0.0
    %168 = vmatmul.mubr.f32.gmra.mrb[0].mxu0 %v78
    %v169 = vpop.f32.mrb[0].mxu0
    %v170 = vadd.f32 %v71, %v169
    %v171 = vpop.f32.mrb[0].mxu0
    %172 = vmatprep.mubr.f32.mxu0 0.0
    %173 = vmatmul.mubr.f32.gmra.mrb[0].mxu0 %v81
    %v174 = vpop.f32.mrb[0].mxu0
    %v175 = vadd.f32 %v71, %v174
    %v176 = vpop.f32.mrb[0].mxu0
    %177 = vmatprep.mubr.f32.mxu0 0.0
    %178 = vmatmul.mubr.f32.gmra.mrb[0].mxu0 %v84
    %v179 = vpop.f32.mrb[0].mxu0
    %v180 = vadd.f32 %v71, %v179
    %v181 = vpop.f32.mrb[0].mxu0
    %182 = vmatprep.mubr.f32.mxu0 0.0
    %183 = vmatmul.mubr.f32.gmra.mrb[0].mxu0 %v87
    %v184 = vpop.f32.mrb[0].mxu0
    %v185 = vadd.f32 %v71, %v184
    %v186 = vpop.f32.mrb[0].mxu0
    %187 = vmatprep.mubr.f32.mxu0 0.0
    %188 = vmatmul.mubr.f32.gmra.mrb[0].mxu0 %v90
    %v189 = vpop.f32.mrb[0].mxu0
    %v190 = vadd.f32 %v71, %v189
    %v191 = vpop.f32.mrb[0].mxu0
    %192 = vmatprep.mubr.f32.mxu0 0.0
    %193 = vmatmul.mubr.f32.gmra.mrb[0].mxu0 %v93
    %v194 = vpop.f32.mrb[0].mxu0
    %v195 = vadd.f32 %v71, %v194
    %v196 = vpop.f32.mrb[0].mxu0
    %197 = vmatprep.mubr.f32.mxu0 0.0
    %198 = vmatmul.mubr.f32.gmra.mrb[0].mxu0 %v96
    %v199 = vpop.f32.mrb[0].mxu0
    %v200 = vadd.f32 %v71, %v199
    %v201 = vpop.f32.mrb[0].mxu0
    %202 = vdwg.mxu0
    %203 = vst [vmem:[#allocation8] sm:$0xff] %v165
    %204 = vst [vmem:[#allocation8 + $0x8] sm:$0xff] %v170
    %205 = vst [vmem:[#allocation8 + $0x10] sm:$0xff] %v175
    %206 = vst [vmem:[#allocation8 + $0x18] sm:$0xff] %v180
    %207 = vst [vmem:[#allocation8 + $0x20] sm:$0xff] %v185
    %208 = vst [vmem:[#allocation8 + $0x28] sm:$0xff] %v190
    %209 = vst [vmem:[#allocation8 + $0x30] sm:$0xff] %v195
    %210 = vst [vmem:[#allocation8 + $0x38] sm:$0xff] %v200
    // Predicated region
    $region26: #{tpu_custom_call.1} parent=1 // pred_check
      _
    $region27: #{tpu_custom_call.1} parent=1 // pred_check_branch
      %212 = sbr.rel (0) target = $region29
    $region28: #{tpu_custom_call.1} parent=1 // pred_region
      %s214 = ssub.s32 1024, 1024
      %215 = vsyncadd [#allocation4], %s214
      %s216 = sshll.u32 [#allocation8], 4
      %s217 = int_to_ptr.vmem [resolvable:$true] %s216
      %222 = dma.vmem_to_hbm [thread:$0]  %s217, 1024, %s3, [#allocation4], 128, 128, 8
    $region29: #{tpu_custom_call.1} parent=1 // pred_fallthru
      _
    // Predicated region
    $region30: #{tpu_custom_call.1} parent=1 // pred_check
      _
    $region31: #{tpu_custom_call.1} parent=1 // pred_check_branch
      %224 = sbr.rel (0) target = $region33
    $region32: #{tpu_custom_call.1} parent=1 // pred_region
      %225 = dma.done [#allocation4], 1024
    $region33: #{tpu_custom_call.1} parent=1 // pred_fallthru
      _
    %226 = vsyncpa [#allocation3], 1
    %227 = vsyncpa [#allocation6], 1
    %228 = vsyncpa [#allocation4], 1

</llo_original>
